<compile_context>
chip_gen: v6e
topology: v6e:2x2x1
jax: 0.10.0
libtpu: 0.0.40
codegen_flags: <defaults>
</compile_context>

<pallas_src>
import functools

import jax
import jax.numpy as jnp
from jax.experimental import pallas as pl
from jax.experimental.pallas import tpu as pltpu

EPS = 1e-5  # nn.LayerNorm default


def _round_up(n, m):
    return ((n + m - 1) // m) * m


def _cdiv(a, b):
    return -(-a // b)


def _layernorm_f32(x_ref, gamma_ref, beta_ref):
    """LayerNorm over the trailing dim; statistics in f32 (matches nn.LayerNorm)."""
    x = x_ref[...].astype(jnp.float32)
    mean = jnp.mean(x, axis=-1, keepdims=True)
    centered = x - mean
    var = jnp.mean(centered * centered, axis=-1, keepdims=True)
    x_hat = centered * jax.lax.rsqrt(var + EPS)
    return x_hat * gamma_ref[...].astype(jnp.float32) + beta_ref[...].astype(jnp.float32)


def _prenorm_linear_resident_kernel(x_ref, gamma_ref, beta_ref, w_ref, b_ref, o_ref):
    # Weight-resident path: 1-D grid over row tiles.  The weight / bias have a
    # constant index_map, so Pallas DMAs them once and keeps them in VMEM while
    # row tiles stream through the pipeline.
    y = _layernorm_f32(x_ref, gamma_ref, beta_ref).astype(w_ref.dtype)
    out = jnp.dot(y, w_ref[...], preferred_element_type=jnp.float32)
    out = out + b_ref[...].astype(jnp.float32)
    o_ref[...] = out.astype(o_ref.dtype)


def _prenorm_linear_streamed_kernel(x_ref, gamma_ref, beta_ref, w_ref, b_ref, o_ref, y_ref):
    # Streamed path: grid = (row_tiles, h_tiles) with the H axis innermost and
    # sequential ("arbitrary"), so LayerNorm(x) for the current row tile is
    # computed once at j == 0 into the VMEM scratch y_ref and reused for every
    # H tile of the weight.
    #
    # CORRECTNESS GUARD: do NOT mark the H axis "parallel", reorder the grid to
    # (j, i), or shard j across TensorCores -- y_ref would be read stale.
    j = pl.program_id(1)

    @pl.when(j == 0)
    def _():
        # Single cast to the matmul operand dtype (bf16 stays bf16 for the MXU).
        y_ref[...] = _layernorm_f32(x_ref, gamma_ref, beta_ref).astype(y_ref.dtype)

    out = jnp.dot(y_ref[...], w_ref[...], preferred_element_type=jnp.float32)
    out = out + b_ref[...].astype(jnp.float32)
    o_ref[...] = out.astype(o_ref.dtype)


def _vmem_capacity_bytes():
    """Physical VMEM per TensorCore; conservative fallback if query fails."""
    try:
        info = pltpu.get_tpu_info()
        cap = getattr(info, "vmem_capacity_bytes", None)
        if cap:
            return int(cap)
    except Exception:
        pass
    return 64 * 1024 * 1024  # v7x per-TC size: safe lower bound everywhere


@functools.partial(jax.jit, static_argnames=("tm", "tn", "mxu_dtype"))
def prenorm_linear(x, gamma, beta, w, b, *, tm=None, tn=None, mxu_dtype=None):
    """fn(LayerNorm(x)) with fn = Linear(dim -> hidden), fused in one Pallas kernel.

    x: (B, S, D); gamma, beta: (D,); w: (D, H); b: (H,)  ->  (B, S, H)

    tm / tn: optional row / hidden tile overrides (None = generation-aware pick).
    mxu_dtype: optional matmul operand dtype (e.g. jnp.bfloat16 on v5e for f32
      inputs); LayerNorm statistics and accumulation stay f32 regardless.
    """
    B, S, D = x.shape
    H = w.shape[1]
    rows = B * S
    out_dtype = x.dtype

    if mxu_dtype is not None:
        w = w.astype(mxu_dtype)

    # ---- H padding: only the (small, one-shot) weight / bias are padded, and
    # only when H is not 128-aligned, so output stores stay lane-dense.  x is
    # NEVER padded or copied in HBM.
    if H % 128 == 0:
        H_p, w_p, b_p = H, w, b
    else:
        H_p = _round_up(H, 128)
        w_p = jnp.pad(w, ((0, 0), (0, H_p - H)))
        b_p = jnp.pad(b, ((0, H_p - H),))

    x2 = x.reshape(rows, D)
    gamma2 = gamma.reshape(1, D)
    beta2 = beta.reshape(1, D)
    b2 = b_p.reshape(1, H_p)

    x_bytes = x.dtype.itemsize
    w_bytes = w_p.dtype.itemsize
    o_bytes = jnp.dtype(out_dtype).itemsize

    # ---- Generation-aware VMEM budget and default tile sizes.
    vmem_cap = _vmem_capacity_bytes()
    big_vmem = vmem_cap >= 100 * 1024 * 1024          # v5e/v6e (128 MiB) vs v7x (64 MiB/TC)
    vmem_limit = min(vmem_cap * 3 // 4, 96 * 1024 * 1024)
    budget = int(vmem_limit * 0.9)

    tm_req = tm if tm is not None else (2048 if big_vmem else 1024)
    tn_req = tn if tn is not None else (1024 if big_vmem else 512)
    tn_req = min(max(128, _round_up(tn_req, 128)), H_p)

    # ---- H (N) tiling: weight-resident fast path when the double-buffered
    # (D, H) weight fits comfortably; otherwise stream lane-dense weight tiles.
    if tn is not None:
        tn_eff = tn_req
    elif 2 * D * H_p * w_bytes <= budget // 2:
        tn_eff = H_p                                   # weight stays resident in VMEM
    else:
        tn_eff = tn_req
    grid_h = _cdiv(H_p, tn_eff)

    # ---- Row (M) tiling: solve the largest tm that fits the remaining VMEM
    # (x tile + out tile double-buffered, plus the LN scratch on the streamed path).
    per_row_bytes = 2 * D * x_bytes + 2 * tn_eff * o_bytes + (D * w_bytes if grid_h > 1 else 0)
    fixed_bytes = 2 * D * tn_eff * w_bytes + 2 * tn_eff * o_bytes + 4 * D * 4
    tm_fit = max(8, (budget - fixed_bytes) // max(per_row_bytes, 1))
    tm_eff = min(tm_req, tm_fit)
    tm_eff = max(8, (tm_eff // 256) * 256 if tm_eff >= 256 else (tm_eff // 8) * 8)

    if rows <= 8:
        tm_eff = rows                                  # tiny input: one full-extent tile
    else:
        tm_eff = min(tm_eff, _round_up(rows, 8))
        if rows >= 16 and rows < 2 * tm_eff:
            # v7x megacore: guarantee >= 2 row tiles so both TensorCores get work.
            half = _cdiv(rows, 2)
            tm_eff = _round_up(half, 256) if half >= 256 else _round_up(half, 8)
        elif rows < 2 * tm_eff:
            tm_eff = rows                              # 9..15 rows: one full-extent tile
    grid_m = _cdiv(rows, tm_eff)

    if grid_h == 1:
        # -------- Weight-resident path (weight DMA'd once, LN fused per step).
        out2 = pl.pallas_call(
            _prenorm_linear_resident_kernel,
            out_shape=jax.ShapeDtypeStruct((rows, H_p), out_dtype),
            grid_spec=pltpu.PrefetchScalarGridSpec(
                num_scalar_prefetch=0,
                grid=(grid_m,),
                in_specs=[
                    pl.BlockSpec((tm_eff, D), lambda i: (i, 0)),   # x row tile (streams)
                    pl.BlockSpec((1, D), lambda i: (0, 0)),        # gamma
                    pl.BlockSpec((1, D), lambda i: (0, 0)),        # beta
                    pl.BlockSpec((D, H_p), lambda i: (0, 0)),      # full weight, fetched once
                    pl.BlockSpec((1, H_p), lambda i: (0, 0)),      # bias
                ],
                out_specs=pl.BlockSpec((tm_eff, H_p), lambda i: (i, 0)),
            ),
            compiler_params=pltpu.CompilerParams(
                dimension_semantics=("parallel",),
                vmem_limit_bytes=int(vmem_limit),
            ),
        )(x2, gamma2, beta2, w_p, b2)
    else:
        # -------- Streamed path (weight larger than the VMEM budget).
        # TODO(synk): LN at j==0 still serializes ~5-10% behind the MXU here; a
        # skewed (i+1) LN prefetch would need manual double-buffered DMA of x.
        out2 = pl.pallas_call(
            _prenorm_linear_streamed_kernel,
            out_shape=jax.ShapeDtypeStruct((rows, H_p), out_dtype),
            grid_spec=pltpu.PrefetchScalarGridSpec(
                num_scalar_prefetch=0,
                grid=(grid_m, grid_h),
                in_specs=[
                    pl.BlockSpec((tm_eff, D), lambda i, j: (i, 0)),   # x row tile
                    pl.BlockSpec((1, D), lambda i, j: (0, 0)),        # gamma
                    pl.BlockSpec((1, D), lambda i, j: (0, 0)),        # beta
                    pl.BlockSpec((D, tn_eff), lambda i, j: (0, j)),   # weight tile
                    pl.BlockSpec((1, tn_eff), lambda i, j: (0, j)),   # bias tile
                ],
                out_specs=pl.BlockSpec((tm_eff, tn_eff), lambda i, j: (i, j)),
                # LN(x) stash in the matmul operand dtype (bf16 w => bf16 MXU feed).
                scratch_shapes=[pltpu.VMEM((tm_eff, D), w_p.dtype)],
            ),
            compiler_params=pltpu.CompilerParams(
                # Row axis shards across TensorCores; the H axis MUST stay
                # sequential so the LN scratch written at j == 0 is valid for j > 0.
                dimension_semantics=("parallel", "arbitrary"),
                vmem_limit_bytes=int(vmem_limit),
            ),
        )(x2, gamma2, beta2, w_p, b2)

    if H_p != H:
        out2 = out2[:, :H]
    return out2.reshape(B, S, H)


def _reference(x, gamma, beta, w, b):
    x32 = x.astype(jnp.float32)
    mean = jnp.mean(x32, axis=-1, keepdims=True)
    var = jnp.mean((x32 - mean) ** 2, axis=-1, keepdims=True)
    y = (x32 - mean) * jax.lax.rsqrt(var + EPS) * gamma.astype(jnp.float32) \
        + beta.astype(jnp.float32)
    return jnp.dot(y, w.astype(jnp.float32),
                   precision=jax.lax.Precision.HIGHEST) + b.astype(jnp.float32)


if __name__ == "__main__":
    key = jax.random.PRNGKey(0)

    # --- Check 1: f32, small typical PreNorm shapes (weight-resident path) ---
    B, S, D, H = 2, 8, 32, 32
    kx, kg, kb, kw, kbias = jax.random.split(key, 5)
    x = jax.random.normal(kx, (B, S, D), dtype=jnp.float32)
    gamma = jnp.ones((D,), jnp.float32) + 0.01 * jax.random.normal(kg, (D,))
    beta = 0.01 * jax.random.normal(kb, (D,))
    w = jax.random.normal(kw, (D, H), dtype=jnp.float32) / jnp.sqrt(D)
    b = 0.01 * jax.random.normal(kbias, (H,))

    out = jax.block_until_ready(prenorm_linear(x, gamma, beta, w, b))
    ref = _reference(x, gamma, beta, w, b)
    assert out.shape == (B, S, H)
    assert jnp.allclose(out, ref, atol=2e-3, rtol=2e-3), "check 1 failed"

    # --- Check 2: bf16 operands (native MXU dtype) + ragged row count ---
    B2, S2, D2, H2 = 2, 7, 128, 256
    k2 = jax.random.split(key, 3)
    xb = jax.random.normal(k2[0], (B2, S2, D2), dtype=jnp.float32).astype(jnp.bfloat16)
    gb = jnp.ones((D2,), jnp.float32)
    bb = jnp.zeros((D2,), jnp.float32)
    wb = (jax.random.normal(k2[1], (D2, H2), dtype=jnp.float32)
          / jnp.sqrt(D2)).astype(jnp.bfloat16)
    bias_b = 0.01 * jax.random.normal(k2[2], (H2,), dtype=jnp.float32)

    out_b = jax.block_until_ready(prenorm_linear(xb, gb, bb, wb, bias_b))
    ref_b = _reference(xb, gb, bb, wb, bias_b)
    assert out_b.shape == (B2, S2, H2)
    assert jnp.allclose(out_b.astype(jnp.float32), ref_b, atol=1e-1, rtol=5e-2), "check 2 failed"

    # --- Check 3: force the streamed (H-tiled) path with its LN scratch ---
    B3, S3, D3, H3 = 2, 16, 128, 512
    k3 = jax.random.split(jax.random.PRNGKey(0), 5)
    x3 = jax.random.normal(k3[0], (B3, S3, D3), dtype=jnp.float32)
    g3 = jnp.ones((D3,), jnp.float32) + 0.01 * jax.random.normal(k3[1], (D3,))
    be3 = 0.01 * jax.random.normal(k3[2], (D3,))
    w3 = jax.random.normal(k3[3], (D3, H3), dtype=jnp.float32) / jnp.sqrt(D3)
    b3 = 0.01 * jax.random.normal(k3[4], (H3,))

    out3 = jax.block_until_ready(prenorm_linear(x3, g3, be3, w3, b3, tm=16, tn=128))
    ref3 = _reference(x3, g3, be3, w3, b3)
    assert out3.shape == (B3, S3, H3)
    assert jnp.allclose(out3, ref3, atol=2e-3, rtol=2e-3), "check 3 failed"

    print("KERNEL_OK")
</pallas_src>

<mosaic_0001>
module attributes {stable_mosaic.version = 11 : i64} {
  func.func @_prenorm_linear_resident_kernel(%arg0: i32, %arg1: memref<8x32xf32, #tpu.memory_space<vmem>>, %arg2: memref<1x32xf32, #tpu.memory_space<vmem>>, %arg3: memref<1x32xf32, #tpu.memory_space<vmem>>, %arg4: memref<32x128xf32, #tpu.memory_space<vmem>>, %arg5: memref<1x128xf32, #tpu.memory_space<vmem>>, %arg6: memref<8x128xf32, #tpu.memory_space<vmem>>) attributes {dimension_semantics = [#tpu.dimension_semantics<parallel>], iteration_bounds = array<i64: 2>, scalar_prefetch = 0 : i64, scratch_operands = 0 : i64, tpu.core_type = #tpu.core_type<tc>, window_params = [{transform_indices = @transform_0, window_bounds = array<i64: 8, 32>}, {pipeline_mode = #tpu.pipeline_mode<synchronous>, transform_indices = @transform_1, window_bounds = array<i64: 1, 32>}, {pipeline_mode = #tpu.pipeline_mode<synchronous>, transform_indices = @transform_2, window_bounds = array<i64: 1, 32>}, {pipeline_mode = #tpu.pipeline_mode<synchronous>, transform_indices = @transform_3, window_bounds = array<i64: 32, 128>}, {pipeline_mode = #tpu.pipeline_mode<synchronous>, transform_indices = @transform_4, window_bounds = array<i64: 1, 128>}, {transform_indices = @transform_5, window_bounds = array<i64: 8, 128>}]} {
    %c0 = arith.constant 0 : index
    %c0_0 = arith.constant 0 : index
    %0 = vector.load %arg1[%c0, %c0_0] : memref<8x32xf32, #tpu.memory_space<vmem>>, vector<8x32xf32>
    %cst = arith.constant dense<0.000000e+00> : vector<8xf32>
    %1 = vector.multi_reduction <add>, %0, %cst [1] : vector<8x32xf32> to vector<8xf32>
    %2 = vector.shape_cast %1 : vector<8xf32> to vector<8x1xf32>
    %cst_1 = arith.constant 3.200000e+01 : f32
    %3 = vector.broadcast %cst_1 : f32 to vector<8x1xf32>
    %4 = arith.divf %2, %3 : vector<8x1xf32>
    %5 = vector.broadcast %4 : vector<8x1xf32> to vector<8x32xf32>
    %6 = arith.subf %0, %5 : vector<8x32xf32>
    %7 = arith.mulf %6, %6 : vector<8x32xf32>
    %cst_2 = arith.constant dense<0.000000e+00> : vector<8xf32>
    %8 = vector.multi_reduction <add>, %7, %cst_2 [1] : vector<8x32xf32> to vector<8xf32>
    %9 = vector.shape_cast %8 : vector<8xf32> to vector<8x1xf32>
    %cst_3 = arith.constant 3.200000e+01 : f32
    %10 = vector.broadcast %cst_3 : f32 to vector<8x1xf32>
    %11 = arith.divf %9, %10 : vector<8x1xf32>
    %cst_4 = arith.constant 9.99999974E-6 : f32
    %12 = vector.broadcast %cst_4 : f32 to vector<8x1xf32>
    %13 = arith.addf %11, %12 : vector<8x1xf32>
    %14 = math.rsqrt %13 : vector<8x1xf32>
    %15 = vector.broadcast %14 : vector<8x1xf32> to vector<8x32xf32>
    %16 = arith.mulf %6, %15 : vector<8x32xf32>
    %c0_5 = arith.constant 0 : index
    %c0_6 = arith.constant 0 : index
    %17 = vector.load %arg2[%c0_5, %c0_6] : memref<1x32xf32, #tpu.memory_space<vmem>>, vector<1x32xf32>
    %18 = vector.broadcast %17 : vector<1x32xf32> to vector<8x32xf32>
    %19 = arith.mulf %16, %18 : vector<8x32xf32>
    %c0_7 = arith.constant 0 : index
    %c0_8 = arith.constant 0 : index
    %20 = vector.load %arg3[%c0_7, %c0_8] : memref<1x32xf32, #tpu.memory_space<vmem>>, vector<1x32xf32>
    %21 = vector.broadcast %20 : vector<1x32xf32> to vector<8x32xf32>
    %22 = arith.addf %19, %21 : vector<8x32xf32>
    %c0_9 = arith.constant 0 : index
    %c0_10 = arith.constant 0 : index
    %23 = vector.load %arg4[%c0_9, %c0_10] : memref<32x128xf32, #tpu.memory_space<vmem>>, vector<32x128xf32>
    %cst_11 = arith.constant dense<0.000000e+00> : vector<8x128xf32>
    %24 = tpu.matmul %22, %23, %cst_11 {dimension_numbers = #tpu.dot_dimension_numbers<[1], [0], [0], [1], [0, 0, 1, 1], [], []>} : vector<8x32xf32>, vector<32x128xf32>, vector<8x128xf32> -> vector<8x128xf32>
    %c0_12 = arith.constant 0 : index
    %c0_13 = arith.constant 0 : index
    %25 = vector.load %arg5[%c0_12, %c0_13] : memref<1x128xf32, #tpu.memory_space<vmem>>, vector<1x128xf32>
    %26 = vector.broadcast %25 : vector<1x128xf32> to vector<8x128xf32>
    %27 = arith.addf %24, %26 : vector<8x128xf32>
    %c0_14 = arith.constant 0 : index
    %c0_15 = arith.constant 0 : index
    %28 = vector.load %arg6[%c0_14, %c0_15] : memref<8x128xf32, #tpu.memory_space<vmem>>, vector<8x128xf32>
    tpu.vector_store %arg6[%c0_14, %c0_15], %27 {strides = array<i32>} : memref<8x128xf32, #tpu.memory_space<vmem>>, vector<8x128xf32>,
    return
  }
  func.func @transform_0(%arg0: i32) -> (i32, i32) {
    %c0_i32 = arith.constant 0 : i32
    %c0_i32_0 = arith.constant 0 : i32
    return %arg0, %c0_i32 : i32, i32
  }
  func.func @transform_1(%arg0: i32) -> (i32, i32) {
    %c0_i32 = arith.constant 0 : i32
    %c0_i32_0 = arith.constant 0 : i32
    %c0_i32_1 = arith.constant 0 : i32
    return %c0_i32, %c0_i32_0 : i32, i32
  }
  func.func @transform_2(%arg0: i32) -> (i32, i32) {
    %c0_i32 = arith.constant 0 : i32
    %c0_i32_0 = arith.constant 0 : i32
    %c0_i32_1 = arith.constant 0 : i32
    return %c0_i32, %c0_i32_0 : i32, i32
  }
  func.func @transform_3(%arg0: i32) -> (i32, i32) {
    %c0_i32 = arith.constant 0 : i32
    %c0_i32_0 = arith.constant 0 : i32
    %c0_i32_1 = arith.constant 0 : i32
    return %c0_i32, %c0_i32_0 : i32, i32
  }
  func.func @transform_4(%arg0: i32) -> (i32, i32) {
    %c0_i32 = arith.constant 0 : i32
    %c0_i32_0 = arith.constant 0 : i32
    %c0_i32_1 = arith.constant 0 : i32
    return %c0_i32, %c0_i32_0 : i32, i32
  }
  func.func @transform_5(%arg0: i32) -> (i32, i32) {
    %c0_i32 = arith.constant 0 : i32
    %c0_i32_0 = arith.constant 0 : i32
    return %arg0, %c0_i32 : i32, i32
  }
}

</mosaic_0001>

<llo_original>
// kernel: prenorm_linear.1
$region0: #{prenorm_linear.1}
  #allocation0 [shape = 'u32[]', space=smem, size = 0x4, offset = 0x4, fixed_abs, tag = 'smem constant byte address 0x4 - core index']
  #allocation1 [shape = 'u32[144,128]{1,0:T(1,128)}', space=vmem, size = 0x12000, scoped, tag = 'internal scratch']
  %s0 = inlined_call_operand.vmem [shape: f32[16,32], index: 0, kind: input, shape index: {}]
  %s1 = inlined_call_operand.vmem [shape: f32[1,32], index: 1, kind: input, shape index: {}]
  %s2 = inlined_call_operand.vmem [shape: f32[1,32], index: 2, kind: input, shape index: {}]
  %s3 = inlined_call_operand.vmem [shape: f32[32,128], index: 3, kind: input, shape index: {}]
  %s4 = inlined_call_operand.vmem [shape: f32[1,128], index: 4, kind: input, shape index: {}]
  %s5 = inlined_call_operand.vmem [shape: f32[16,128], index: 5, kind: output, shape index: {}]
  %s6 = sld [smem:[#allocation0]]
  $region53: #{prenorm_linear.1} parent=0
    _
  %s8 = ssub.s32 1, %s6
  %s9 = scalar_select 0, %s8, %s6
  loop: start=0, step=1, limit=4
  $region2: #{prenorm_linear.1} parent=0 // loop_pre_header
    _
  $region3: #{prenorm_linear.1} parent=0 // loop_header
    %s11 = sphi 0, %s15
    %p12 = scmp.ge.s32.totalorder %s11, 4
    %s21 = sphi 0, %s23
    %s24 = sphi 0, %s21
    %s25 = sphi 0, %s24
    %s41 = sphi 0, %s25
    %s45 = sphi 0, %s45
    %s47 = sphi 0, %s45
    %s48 = sphi 0, %s47
    %s62 = sphi 0, %s48
    %s66 = sphi 0, %s66
    %s68 = sphi 0, %s66
    %s69 = sphi 0, %s68
    %s83 = sphi 0, %s69
    %s87 = sphi 0, %s87
    %s89 = sphi 0, %s87
    %s90 = sphi 0, %s89
    %s104 = sphi 0, %s90
    %s108 = sphi 0, %s108
    %s110 = sphi 0, %s108
    %s111 = sphi 0, %s110
    %s125 = sphi 0, %s111
    %s131 = sphi 0, %s133
    %s134 = sphi 0, %s131
    %s135 = sphi 0, %s134
    %s151 = sphi 0, %s135
  $region4: #{prenorm_linear.1} parent=0 // loop_header_branch
    %14 = sbr.rel (%p12) target = $region8
  $region5: #{prenorm_linear.1} parent=0 // loop_body
    %s16 = ssub.s32 %s11, 1
    %s17 = ssub.s32 %s11, 2
    %s18 = sadd.s32 %s11, 1
    %s19 = ssub.s32 %s11, %s18
    %p20 = scmp.eq.s32.totalorder %s19, 0
    %s22 = sadd.s32 %s21, 1
    %s23 = scalar_select %p20, %s21, %s22
    %p26 = pneg %p20
    %p27 = scmp.eq.s32.totalorder %s11, 1
    %p28 = por %p26, %p27
    %p29 = scmp.ne.s32.totalorder %s21, %s24
    %p30 = scmp.eq.s32.totalorder %s11, 0
    %p31 = por %p29, %p30
    %p32 = scmp.ne.s32.totalorder %s21, %s24
    %p33 = scmp.eq.s32.totalorder %s16, 1
    %p34 = por %p32, %p33
    %p35 = scmp.ne.s32.totalorder %s24, %s25
    %p36 = scmp.eq.s32.totalorder %s16, 0
    %p37 = por %p35, %p36
    %p38 = scmp.ne.s32.totalorder %s24, %s25
    %p39 = scmp.eq.s32.totalorder %s17, 1
    %p40 = por %p38, %p39
    %p42 = scmp.ne.s32.totalorder %s25, %s41
    %p43 = scmp.eq.s32.totalorder %s17, 0
    %p44 = por %p42, %p43
    %s46 = sadd.s32 %s45, 1
    %p49 = scmp.eq.s32.totalorder %s11, 1
    %p50 = scmp.ne.s32.totalorder %s45, %s47
    %p51 = scmp.eq.s32.totalorder %s11, 0
    %p52 = por %p50, %p51
    %p53 = scmp.ne.s32.totalorder %s45, %s47
    %p54 = scmp.eq.s32.totalorder %s16, 1
    %p55 = por %p53, %p54
    %p56 = scmp.ne.s32.totalorder %s47, %s48
    %p57 = scmp.eq.s32.totalorder %s16, 0
    %p58 = por %p56, %p57
    %p59 = scmp.ne.s32.totalorder %s47, %s48
    %p60 = scmp.eq.s32.totalorder %s17, 1
    %p61 = por %p59, %p60
    %p63 = scmp.ne.s32.totalorder %s48, %s62
    %p64 = scmp.eq.s32.totalorder %s17, 0
    %p65 = por %p63, %p64
    %s67 = sadd.s32 %s66, 1
    %p70 = scmp.eq.s32.totalorder %s11, 1
    %p71 = scmp.ne.s32.totalorder %s66, %s68
    %p72 = scmp.eq.s32.totalorder %s11, 0
    %p73 = por %p71, %p72
    %p74 = scmp.ne.s32.totalorder %s66, %s68
    %p75 = scmp.eq.s32.totalorder %s16, 1
    %p76 = por %p74, %p75
    %p77 = scmp.ne.s32.totalorder %s68, %s69
    %p78 = scmp.eq.s32.totalorder %s16, 0
    %p79 = por %p77, %p78
    %p80 = scmp.ne.s32.totalorder %s68, %s69
    %p81 = scmp.eq.s32.totalorder %s17, 1
    %p82 = por %p80, %p81
    %p84 = scmp.ne.s32.totalorder %s69, %s83
    %p85 = scmp.eq.s32.totalorder %s17, 0
    %p86 = por %p84, %p85
    %s88 = sadd.s32 %s87, 1
    %p91 = scmp.eq.s32.totalorder %s11, 1
    %p92 = scmp.ne.s32.totalorder %s87, %s89
    %p93 = scmp.eq.s32.totalorder %s11, 0
    %p94 = por %p92, %p93
    %p95 = scmp.ne.s32.totalorder %s87, %s89
    %p96 = scmp.eq.s32.totalorder %s16, 1
    %p97 = por %p95, %p96
    %p98 = scmp.ne.s32.totalorder %s89, %s90
    %p99 = scmp.eq.s32.totalorder %s16, 0
    %p100 = por %p98, %p99
    %p101 = scmp.ne.s32.totalorder %s89, %s90
    %p102 = scmp.eq.s32.totalorder %s17, 1
    %p103 = por %p101, %p102
    %p105 = scmp.ne.s32.totalorder %s90, %s104
    %p106 = scmp.eq.s32.totalorder %s17, 0
    %p107 = por %p105, %p106
    %s109 = sadd.s32 %s108, 1
    %p112 = scmp.eq.s32.totalorder %s11, 1
    %p113 = scmp.ne.s32.totalorder %s108, %s110
    %p114 = scmp.eq.s32.totalorder %s11, 0
    %p115 = por %p113, %p114
    %p116 = scmp.ne.s32.totalorder %s108, %s110
    %p117 = scmp.eq.s32.totalorder %s16, 1
    %p118 = por %p116, %p117
    %p119 = scmp.ne.s32.totalorder %s110, %s111
    %p120 = scmp.eq.s32.totalorder %s16, 0
    %p121 = por %p119, %p120
    %p122 = scmp.ne.s32.totalorder %s110, %s111
    %p123 = scmp.eq.s32.totalorder %s17, 1
    %p124 = por %p122, %p123
    %p126 = scmp.ne.s32.totalorder %s111, %s125
    %p127 = scmp.eq.s32.totalorder %s17, 0
    %p128 = por %p126, %p127
    %s129 = ssub.s32 %s11, %s18
    %p130 = scmp.eq.s32.totalorder %s129, 0
    %s132 = sadd.s32 %s131, 1
    %s133 = scalar_select %p130, %s131, %s132
    %p136 = pneg %p130
    %p137 = scmp.eq.s32.totalorder %s11, 1
    %p138 = por %p136, %p137
    %p139 = scmp.ne.s32.totalorder %s131, %s134
    %p140 = scmp.eq.s32.totalorder %s11, 0
    %p141 = por %p139, %p140
    %p142 = scmp.ne.s32.totalorder %s131, %s134
    %p143 = scmp.eq.s32.totalorder %s16, 1
    %p144 = por %p142, %p143
    %p145 = scmp.ne.s32.totalorder %s134, %s135
    %p146 = scmp.eq.s32.totalorder %s16, 0
    %p147 = por %p145, %p146
    %p148 = scmp.ne.s32.totalorder %s134, %s135
    %p149 = scmp.eq.s32.totalorder %s17, 1
    %p150 = por %p148, %p149
    %p152 = scmp.ne.s32.totalorder %s135, %s151
    %p153 = scmp.eq.s32.totalorder %s17, 0
    %p154 = por %p152, %p153
    %p155 = scmp.le.s32.totalorder 1, %s11
    %p156 = scmp.lt.s32.totalorder %s11, 3
    %p157 = pnand %p155, %p156
    %p158 = pneg %p157
    // Predicated region
    $region9: #{prenorm_linear.1} parent=5 // pred_check
      _
    $region10: #{prenorm_linear.1} parent=5 // pred_check_branch
      %160 = sbr.rel (%p157) target = $region12
    $region11: #{prenorm_linear.1} parent=5 // pred_region
      %s161 = ssub.s32 %s11, 1
      // Predicated region
      $region13: #{prenorm_linear.1} parent=11 // pred_check
        %p162 = pneg %p58
      $region14: #{prenorm_linear.1} parent=11 // pred_check_branch
        %164 = sbr.rel (%p162) target = $region16
      $region15: #{prenorm_linear.1} parent=11 // pred_region
        _
      $region16: #{prenorm_linear.1} parent=11 // pred_fallthru
        _
      // Predicated region
      $region17: #{prenorm_linear.1} parent=11 // pred_check
        %p165 = pneg %p79
      $region18: #{prenorm_linear.1} parent=11 // pred_check_branch
        %167 = sbr.rel (%p165) target = $region20
      $region19: #{prenorm_linear.1} parent=11 // pred_region
        _
      $region20: #{prenorm_linear.1} parent=11 // pred_fallthru
        _
      // Predicated region
      $region21: #{prenorm_linear.1} parent=11 // pred_check
        %p168 = pneg %p100
      $region22: #{prenorm_linear.1} parent=11 // pred_check_branch
        %170 = sbr.rel (%p168) target = $region24
      $region23: #{prenorm_linear.1} parent=11 // pred_region
        _
      $region24: #{prenorm_linear.1} parent=11 // pred_fallthru
        _
      // Predicated region
      $region25: #{prenorm_linear.1} parent=11 // pred_check
        %p171 = pneg %p121
      $region26: #{prenorm_linear.1} parent=11 // pred_check_branch
        %173 = sbr.rel (%p171) target = $region28
      $region27: #{prenorm_linear.1} parent=11 // pred_region
        _
      $region28: #{prenorm_linear.1} parent=11 // pred_fallthru
        _
    $region12: #{prenorm_linear.1} parent=5 // pred_fallthru
      _
    %p174 = scmp.lt.s32.totalorder %s11, 2
    // Predicated region
    $region29: #{prenorm_linear.1} parent=5 // pred_check
      %p175 = pneg %p174
    $region30: #{prenorm_linear.1} parent=5 // pred_check_branch
      %177 = sbr.rel (%p175) target = $region32
    $region31: #{prenorm_linear.1} parent=5 // pred_region
      // Predicated region
      $region33: #{prenorm_linear.1} parent=31 // pred_check
        %p178 = pneg %p31
      $region34: #{prenorm_linear.1} parent=31 // pred_check_branch
        %180 = sbr.rel (%p178) target = $region36
      $region35: #{prenorm_linear.1} parent=31 // pred_region
        %p181 = scmp.lt.s32.totalorder %s11, 1
        %s182 = scalar_select %p181, %s11, 1
        %s183 = smul.addr %s182, 8
        %s184 = scalar_lea.vmem %s0, %s183
      $region36: #{prenorm_linear.1} parent=31 // pred_fallthru
        _
    $region32: #{prenorm_linear.1} parent=5 // pred_fallthru
      _
    %p185 = scmp.le.s32.totalorder 1, %s11
    %p186 = scmp.lt.s32.totalorder %s11, 3
    %p187 = pnand %p185, %p186
    %p188 = pneg %p187
    // Predicated region
    $region37: #{prenorm_linear.1} parent=5 // pred_check
      _
    $region38: #{prenorm_linear.1} parent=5 // pred_check_branch
      %190 = sbr.rel (%p187) target = $region40
    $region39: #{prenorm_linear.1} parent=5 // pred_region
      %s191 = ssub.s32 %s11, 1
      %p192 = scmp.lt.s32.totalorder %s16, 1
      %s193 = scalar_select %p192, %s16, 1
      %s194 = smul.addr %s193, 8
      %s195 = scalar_lea.vmem %s0, %s194
      %p196 = pneg %p37
      %p197 = pneg %p34
      %p198 = pneg %p58
      %p199 = pneg %p55
      %p200 = pneg %p79
      %p201 = pneg %p76
      %p202 = pneg %p100
      %p203 = pneg %p97
      %p204 = pneg %p121
      %p205 = pneg %p118
      %p206 = pneg %p147
      %p207 = pneg %p144
      %p208 = scmp.lt.s32.totalorder %s16, 1
      %s209 = scalar_select %p208, %s16, 1
      %s210 = smul.addr %s209, 8
      %s211 = scalar_lea.vmem %s5, %s210
      %p212 = scmp.lt.s32.totalorder %s16, 1
      %s213 = scalar_select %p212, %s16, 1
      %s214 = smul.addr %s213, 8
      %s215 = scalar_lea.vmem %s0, %s214
      %p216 = scmp.lt.s32.totalorder %s16, 1
      %s217 = scalar_select %p216, %s16, 1
      %s218 = smul.addr %s217, 8
      %s219 = scalar_lea.vmem %s5, %s218
      %v220 = vld [vmem:[%s215] sm:$0xff]
      %vm221 = vcmask 261120
      %v222 = vsel %vm221, %v220, 0.0
      %223 = vadd.xlane.f32.xlu0 %v222
      %v224 = vpop.xlane.xlu0 %223
      %v225 = vrcp.pop 32.0
      %v226 = vmul.f32 %v224, %v225
      %v227 = vsub.f32 %v220, %v226
      %v228 = vmul.f32 %v227, %v227
      %v229 = vsel %vm221, %v228, 0.0
      %230 = vadd.xlane.f32.xlu0 %v229
      %v231 = vpop.xlane.xlu0 %230
      %v232 = vmul.f32 %v231, %v225
      %v233 = vadd.f32 %v232, 1e-05
      %v234 = vrsqrt.pop %v233
      %v235 = vmul.f32 %v227, %v234
      %v236 = vld [vmem:[%s1] sm:$0x1]
      %v238 = vlaneseq
      %v239 = vshrl.u32 %v238, 7
      %v240 = vsub.s32 0, %v239
      %v241 = vrot.slane %v236, %v240
      %v243 = vmul.f32 %v235, %v241
      %v244 = vld [vmem:[%s2] sm:$0x1]
      %v246 = vlaneseq
      %v247 = vshrl.u32 %v246, 7
      %v248 = vsub.s32 0, %v247
      %v249 = vrot.slane %v244, %v248
      %v251 = vadd.f32 %v243, %v249
      %v252 = vld [vmem:[%s3] sm:$0xff]
      %v253 = vld [vmem:[%s3 + $0x8] sm:$0xff]
      %v254 = vld [vmem:[%s3 + $0x10] sm:$0xff]
      %v255 = vld [vmem:[%s3 + $0x18] sm:$0xff]
      %v256 = vld [vmem:[%s4] sm:$0x1]
      %v258 = vlaneseq
      %v259 = vshrl.u32 %v258, 7
      %v260 = vsub.s32 0, %v259
      %v261 = vrot.slane %v256, %v260
      %v264 = vsel %vm221, %v251, 0
      %266 = vmatprep.subr.mxu0 0.0
      %267 = vmatpush1.msra.mxu0 0.0
      %268 = vmatprep.subr.mxu0 0.0
      %269 = vmatpush1.msra.mxu0 0.0
      %270 = vmatprep.subr.mxu0 0.0
      %271 = vmatpush1.msra.mxu0 0.0
      %272 = vmatprep.subr.mxu0 0.0
      %273 = vmatpush1.msra.mxu0 0.0
      %274 = vmatprep.subr.mxu0 0.0
      %275 = vmatpush1.msra.mxu0 0.0
      %276 = vmatprep.subr.mxu0 0.0
      %277 = vmatpush1.msra.mxu0 0.0
      %278 = vmatprep.subr.mxu0 0.0
      %279 = vmatpush1.msra.mxu0 0.0
      %280 = vmatprep.subr.mxu0 0.0
      %281 = vmatpush1.msra.mxu0 0.0
      %282 = vmatprep.subr.mxu0 0.0
      %283 = vmatpush1.msra.mxu0 0.0
      %284 = vmatprep.subr.mxu0 0.0
      %285 = vmatpush1.msra.mxu0 0.0
      %286 = vmatprep.subr.mxu0 0.0
      %287 = vmatpush1.msra.mxu0 0.0
      %288 = vmatprep.subr.mxu0 0.0
      %289 = vmatpush1.msra.mxu0 0.0
      %290 = vmatprep.subr.mxu0 0.0
      %291 = vmatpush1.msra.mxu0 %v255
      %292 = vmatprep.subr.mxu0 0.0
      %293 = vmatpush1.msra.mxu0 %v254
      %294 = vmatprep.subr.mxu0 0.0
      %295 = vmatpush1.msra.mxu0 %v253
      %296 = vmatprep.subr.mxu0 0.0
      %297 = vmatpush1.msra.mxu0 %v252
      %298 = vmatprep.subr.mxu0 0.0
      %299 = vmatpush2.msra.mxu0 0.0
      %300 = vmatprep.subr.mxu0 0.0
      %301 = vmatpush2.msra.mxu0 0.0
      %302 = vmatprep.subr.mxu0 0.0
      %303 = vmatpush2.msra.mxu0 0.0
      %304 = vmatprep.subr.mxu0 0.0
      %305 = vmatpush2.msra.mxu0 0.0
      %306 = vmatprep.subr.mxu0 0.0
      %307 = vmatpush2.msra.mxu0 0.0
      %308 = vmatprep.subr.mxu0 0.0
      %309 = vmatpush2.msra.mxu0 0.0
      %310 = vmatprep.subr.mxu0 0.0
      %311 = vmatpush2.msra.mxu0 0.0
      %312 = vmatprep.subr.mxu0 0.0
      %313 = vmatpush2.msra.mxu0 0.0
      %314 = vmatprep.subr.mxu0 0.0
      %315 = vmatpush2.msra.mxu0 0.0
      %316 = vmatprep.subr.mxu0 0.0
      %317 = vmatpush2.msra.mxu0 0.0
      %318 = vmatprep.subr.mxu0 0.0
      %319 = vmatpush2.msra.mxu0 0.0
      %320 = vmatprep.subr.mxu0 0.0
      %321 = vmatpush2.msra.mxu0 0.0
      %322 = vmatprep.subr.mxu0 0.0
      %323 = vmatpush2.msra.mxu0 0.0
      %324 = vmatprep.subr.mxu0 0.0
      %325 = vmatpush2.msra.mxu0 0.0
      %326 = vmatprep.subr.mxu0 0.0
      %327 = vmatpush2.msra.mxu0 0.0
      %328 = vmatprep.subr.mxu0 0.0
      %329 = vmatpush2.msra.mxu0 0.0
      %330 = vmatprep.mubr.f32.mxu0 0.0
      %331 = vmatmul.mubr.f32.gmra.mxu0 %v264
      %v332 = vpop.f32.mrf.mxu0
      %v333 = vadd.f32 %v261, %v332
      %v334 = vpop.f32.mrf.mxu0
      %335 = vdwg.mxu0
      %336 = vst [vmem:[%s219] sm:$0xff] %v333
      %p337 = scmp.lt.s32.totalorder %s16, 1
      %s338 = scalar_select %p337, %s16, 1
      %s339 = smul.addr %s338, 8
      %s340 = scalar_lea.vmem %s5, %s339
      // Predicated region
      $region41: #{prenorm_linear.1} parent=39 // pred_check
        %p341 = pneg %p144
      $region42: #{prenorm_linear.1} parent=39 // pred_check_branch
        %343 = sbr.rel (%p341) target = $region44
      $region43: #{prenorm_linear.1} parent=39 // pred_region
        _
      $region44: #{prenorm_linear.1} parent=39 // pred_fallthru
        _
    $region40: #{prenorm_linear.1} parent=5 // pred_fallthru
      _
    %p344 = scmp.le.s32.totalorder 2, %s11
    // Predicated region
    $region45: #{prenorm_linear.1} parent=5 // pred_check
      %p345 = pneg %p344
    $region46: #{prenorm_linear.1} parent=5 // pred_check_branch
      %347 = sbr.rel (%p345) target = $region48
    $region47: #{prenorm_linear.1} parent=5 // pred_region
      %s348 = ssub.s32 %s11, 2
      // Predicated region
      $region49: #{prenorm_linear.1} parent=47 // pred_check
        %p349 = pneg %p150
      $region50: #{prenorm_linear.1} parent=47 // pred_check_branch
        %351 = sbr.rel (%p349) target = $region52
      $region51: #{prenorm_linear.1} parent=47 // pred_region
        %p352 = scmp.lt.s32.totalorder %s17, 1
        %s353 = scalar_select %p352, %s17, 1
        %s354 = smul.addr %s353, 8
        %s355 = scalar_lea.vmem %s5, %s354
      $region52: #{prenorm_linear.1} parent=47 // pred_fallthru
        _
    $region48: #{prenorm_linear.1} parent=5 // pred_fallthru
      _
  $region6: #{prenorm_linear.1} parent=0 // loop_footer
    %s15 = sadd.s32 1, %s11
  $region7: #{prenorm_linear.1} parent=0 // loop_footer_branch
    %10 = sbr.rel target = $region3
  $region8: #{prenorm_linear.1} parent=0 // loop_exit
    _

</llo_original>
